<compile_context>
chip_gen: v7x
topology: tpu7x:2x2x1
jax: 0.10.0
libtpu: 0.0.40
codegen_flags: <defaults>
</compile_context>

<pallas_src>
import functools

import jax
import jax.numpy as jnp
from jax.experimental import pallas as pl
from jax.experimental.pallas import tpu as pltpu


def _round_up(x, m):
    return ((x + m - 1) // m) * m


def _trailer_text_kernel(x_ref, w1_ref, b1_ref, w2_ref, b2_ref,
                         out_ref, emb_ref):
    # dense1 (+ folded BatchNorm): x @ W1' -> f32 accumulation, bias + ReLU.
    h = jnp.dot(x_ref[...], w1_ref[...], preferred_element_type=jnp.float32)
    h = jnp.maximum(h + b1_ref[...], 0.0)

    # Single cast to the compute dtype, reused for the embed store and the
    # second matmul (movieclip_text_embeds; detach is a no-op forward-only).
    hc = h.astype(emb_ref.dtype)
    emb_ref[...] = hc

    # dense2: h @ W2 + b2 (W2 lane-padded to 128; padded cols are zero).
    y = jnp.dot(hc, w2_ref[...], preferred_element_type=jnp.float32)
    out_ref[...] = (y + b2_ref[...]).astype(out_ref.dtype)


def trailer_text_forward(x, params, *, num_category,
                         compute_dtype=jnp.bfloat16,
                         max_tile_b=1024,
                         vmem_limit_bytes=None):
    """x: [B, text_feature_dim] float32. Returns dict like the PyTorch module."""
    B, D_in = x.shape
    H = params["w1"].shape[1]

    # ---- defensively lane-pad the output head to a multiple of 128 ----
    C = params["w2"].shape[1]
    assert num_category <= C
    C_pad = _round_up(C, 128)
    w2 = params["w2"]
    b2 = params["b2"]
    if C_pad != C:
        w2 = jnp.pad(w2, ((0, 0), (0, C_pad - C)))
        b2 = jnp.pad(b2, ((0, 0), (0, C_pad - C)))

    # ---- host-side BatchNorm fold into dense1 (eval / running stats) ----
    eps = 1e-5
    scale = params["gamma"] * jax.lax.rsqrt(params["running_var"] + eps)  # (1,H)
    w1_f = (params["w1"] * scale).astype(compute_dtype)                   # (D,H)
    b1_f = ((params["b1"] - params["running_mean"]) * scale
            + params["beta"]).astype(jnp.float32)                         # (1,H)
    w2_c = w2.astype(compute_dtype)                                       # (H,Cp)
    b2_c = b2.astype(jnp.float32)                                         # (1,Cp)
    x_c = x.astype(compute_dtype)

    # ---- batch tiling: big MXU-friendly tile, sublane-aligned ----
    sub = 16 if jnp.dtype(compute_dtype) == jnp.bfloat16 else 8
    B_sub = _round_up(B, sub)
    tile_b = min(_round_up(max_tile_b, sub), B_sub)
    # v7x megacore: on large batches keep >= 2 parallel grid steps so both
    # TensorCores get work (only when each half still has >= 128 rows).
    if B_sub >= 256 and B_sub // tile_b < 2:
        tile_b = min(tile_b, _round_up((B_sub + 1) // 2, sub))
    B_pad = _round_up(B_sub, tile_b)
    if B_pad != B:
        x_c = jnp.pad(x_c, ((0, B_pad - B), (0, 0)))

    grid = (B_pad // tile_b,)
    emb_dtype = compute_dtype   # bf16 embeds halve the largest HBM write
    out_dtype = compute_dtype   # bf16 logits halve the padded head write

    # ---- scoped-VMEM budget: computed from actual tiles, clamped 16-32 MiB ----
    if vmem_limit_bytes is None:
        itemsize = jnp.dtype(compute_dtype).itemsize
        step_bytes = tile_b * (D_in + H + C_pad) * itemsize        # x + emb + out tiles
        weight_bytes = (D_in * H + H * C_pad) * itemsize + (H + C_pad) * 4
        need = 2 * (step_bytes + weight_bytes) + (2 << 20)         # double-buffer + margin
        vmem_limit_bytes = min(32 * 1024 * 1024, max(16 * 1024 * 1024, need))

    full = lambda shape: pl.BlockSpec(shape, lambda i: (0, 0))
    batch_tiled = lambda shape: pl.BlockSpec(shape, lambda i: (i, 0))

    out, emb = pl.pallas_call(
        _trailer_text_kernel,
        grid_spec=pltpu.PrefetchScalarGridSpec(
            num_scalar_prefetch=0,
            grid=grid,
            in_specs=[
                batch_tiled((tile_b, D_in)),   # x tile
                full((D_in, H)),               # W1' (BN folded)  - VMEM resident
                full((1, H)),                  # b1' (BN folded)
                full((H, C_pad)),              # W2 (lane-padded) - VMEM resident
                full((1, C_pad)),              # b2 (lane-padded)
            ],
            out_specs=[
                batch_tiled((tile_b, C_pad)),  # logits (lane-dense, padded)
                batch_tiled((tile_b, H)),      # dense1 embeds
            ],
        ),
        out_shape=[
            jax.ShapeDtypeStruct((B_pad, C_pad), out_dtype),
            jax.ShapeDtypeStruct((B_pad, H), emb_dtype),
        ],
        compiler_params=pltpu.CompilerParams(
            dimension_semantics=("parallel",),
            vmem_limit_bytes=vmem_limit_bytes),
    )(x_c, w1_f, b1_f, w2_c, b2_c)

    # Only slice off padded batch rows when padding actually happened
    # (avoids an extra HBM pass over the B x 512 embed buffer).
    logits = out if B_pad == B else out[:B]
    embeds = emb if B_pad == B else emb[:B]
    # Cast the tiny (B, 21) logit slice back to f32 to match the module.
    text_output = logits[:, :num_category].astype(jnp.float32)
    return {
        "text_output": text_output,
        "multimodal_output": text_output,
        "movieclip_text_embeds": embeds,   # compute_dtype (bf16 on fast path)
    }


def init_params(key, text_feature_dim=768, hidden_dim=512, num_category=21):
    """Deterministic synthetic parameters matching the module's shapes."""
    ks = jax.random.split(key, 8)
    w1 = jax.random.normal(ks[0], (text_feature_dim, hidden_dim),
                           jnp.float32) * 0.02
    b1 = jax.random.normal(ks[1], (1, hidden_dim), jnp.float32) * 0.01
    gamma = 1.0 + 0.1 * jax.random.normal(ks[2], (1, hidden_dim), jnp.float32)
    beta = 0.05 * jax.random.normal(ks[3], (1, hidden_dim), jnp.float32)
    running_mean = 0.1 * jax.random.normal(ks[4], (1, hidden_dim), jnp.float32)
    running_var = 0.5 + jax.random.uniform(ks[5], (1, hidden_dim), jnp.float32)
    # Raw, unpadded head weights (same layout as the PyTorch module, transposed
    # to (in, out)); the wrapper lane-pads them defensively.
    w2 = jax.random.normal(ks[6], (hidden_dim, num_category), jnp.float32) * 0.05
    b2 = jax.random.normal(ks[7], (1, num_category), jnp.float32) * 0.01
    return {
        "w1": w1, "b1": b1,
        "gamma": gamma, "beta": beta,
        "running_mean": running_mean, "running_var": running_var,
        "w2": w2, "b2": b2,
    }


def _reference(x, p, num_category):
    h = x @ p["w1"] + p["b1"]
    h = (h - p["running_mean"]) * jax.lax.rsqrt(p["running_var"] + 1e-5) \
        * p["gamma"] + p["beta"]
    h = jnp.maximum(h, 0.0)
    return (h @ p["w2"] + p["b2"])[:, :num_category]


if __name__ == "__main__":
    key = jax.random.PRNGKey(0)
    k_x, k_p = jax.random.split(key)

    B = 8
    text_feature_dim, hidden_dim, num_category = 768, 512, 21

    x = jax.random.normal(k_x, (B, text_feature_dim), jnp.float32)
    params = init_params(k_p, text_feature_dim, hidden_dim, num_category)
    ref = _reference(x, params, num_category)

    # --- f32 path (exact, used for the tight correctness check) ---
    fwd_f32 = jax.jit(functools.partial(trailer_text_forward,
                                        num_category=num_category,
                                        compute_dtype=jnp.float32))
    out = fwd_f32(x, params)
    jax.block_until_ready(out)

    assert out["text_output"].shape == (B, num_category)
    assert out["multimodal_output"].shape == (B, num_category)
    assert out["movieclip_text_embeds"].shape == (B, hidden_dim)
    assert out["text_output"].dtype == jnp.float32
    assert jnp.allclose(out["text_output"], ref, atol=1e-4, rtol=1e-4)

    # --- bf16 path (default; full-rate MXU, half HBM traffic), loose tol ---
    fwd_bf16 = jax.jit(functools.partial(trailer_text_forward,
                                         num_category=num_category))
    out16 = fwd_bf16(x, params)
    jax.block_until_ready(out16)
    assert out16["text_output"].shape == (B, num_category)
    assert out16["text_output"].dtype == jnp.float32
    assert out16["movieclip_text_embeds"].shape == (B, hidden_dim)
    assert jnp.allclose(out16["text_output"], ref, atol=1e-1, rtol=1e-1)

    print("KERNEL_OK")
</pallas_src>

<mosaic_0001>
module attributes {stable_mosaic.version = 11 : i64} {
  func.func @_trailer_text_kernel(%arg0: i32, %arg1: memref<8x768xf32, #tpu.memory_space<vmem>>, %arg2: memref<768x512xf32, #tpu.memory_space<vmem>>, %arg3: memref<1x512xf32, #tpu.memory_space<vmem>>, %arg4: memref<512x128xf32, #tpu.memory_space<vmem>>, %arg5: memref<1x128xf32, #tpu.memory_space<vmem>>, %arg6: memref<8x128xf32, #tpu.memory_space<vmem>>, %arg7: memref<8x512xf32, #tpu.memory_space<vmem>>) attributes {dimension_semantics = [#tpu.dimension_semantics<parallel>], iteration_bounds = array<i64: 1>, scalar_prefetch = 0 : i64, scratch_operands = 0 : i64, tpu.core_type = #tpu.core_type<tc>, window_params = [{transform_indices = @transform_0, window_bounds = array<i64: 8, 768>}, {pipeline_mode = #tpu.pipeline_mode<synchronous>, transform_indices = @transform_1, window_bounds = array<i64: 768, 512>}, {pipeline_mode = #tpu.pipeline_mode<synchronous>, transform_indices = @transform_2, window_bounds = array<i64: 1, 512>}, {pipeline_mode = #tpu.pipeline_mode<synchronous>, transform_indices = @transform_3, window_bounds = array<i64: 512, 128>}, {pipeline_mode = #tpu.pipeline_mode<synchronous>, transform_indices = @transform_4, window_bounds = array<i64: 1, 128>}, {transform_indices = @transform_5, window_bounds = array<i64: 8, 128>}, {transform_indices = @transform_6, window_bounds = array<i64: 8, 512>}]} {
    %c0 = arith.constant 0 : index
    %c0_0 = arith.constant 0 : index
    %0 = vector.load %arg1[%c0, %c0_0] : memref<8x768xf32, #tpu.memory_space<vmem>>, vector<8x768xf32>
    %c0_1 = arith.constant 0 : index
    %c0_2 = arith.constant 0 : index
    %1 = vector.load %arg2[%c0_1, %c0_2] : memref<768x512xf32, #tpu.memory_space<vmem>>, vector<768x512xf32>
    %cst = arith.constant dense<0.000000e+00> : vector<8x512xf32>
    %2 = tpu.matmul %0, %1, %cst {dimension_numbers = #tpu.dot_dimension_numbers<[1], [0], [0], [1], [0, 0, 1, 1], [], []>} : vector<8x768xf32>, vector<768x512xf32>, vector<8x512xf32> -> vector<8x512xf32>
    %c0_3 = arith.constant 0 : index
    %c0_4 = arith.constant 0 : index
    %3 = vector.load %arg3[%c0_3, %c0_4] : memref<1x512xf32, #tpu.memory_space<vmem>>, vector<1x512xf32>
    %4 = vector.broadcast %3 : vector<1x512xf32> to vector<8x512xf32>
    %5 = arith.addf %2, %4 : vector<8x512xf32>
    %cst_5 = arith.constant 0.000000e+00 : f32
    %6 = vector.broadcast %cst_5 : f32 to vector<8x512xf32>
    %7 = arith.maximumf %5, %6 : vector<8x512xf32>
    %c0_6 = arith.constant 0 : index
    %c0_7 = arith.constant 0 : index
    %8 = vector.load %arg7[%c0_6, %c0_7] : memref<8x512xf32, #tpu.memory_space<vmem>>, vector<8x512xf32>
    tpu.vector_store %arg7[%c0_6, %c0_7], %7 {strides = array<i32>} : memref<8x512xf32, #tpu.memory_space<vmem>>, vector<8x512xf32>,
    %c0_8 = arith.constant 0 : index
    %c0_9 = arith.constant 0 : index
    %9 = vector.load %arg4[%c0_8, %c0_9] : memref<512x128xf32, #tpu.memory_space<vmem>>, vector<512x128xf32>
    %cst_10 = arith.constant dense<0.000000e+00> : vector<8x128xf32>
    %10 = tpu.matmul %7, %9, %cst_10 {dimension_numbers = #tpu.dot_dimension_numbers<[1], [0], [0], [1], [0, 0, 1, 1], [], []>} : vector<8x512xf32>, vector<512x128xf32>, vector<8x128xf32> -> vector<8x128xf32>
    %c0_11 = arith.constant 0 : index
    %c0_12 = arith.constant 0 : index
    %11 = vector.load %arg5[%c0_11, %c0_12] : memref<1x128xf32, #tpu.memory_space<vmem>>, vector<1x128xf32>
    %12 = vector.broadcast %11 : vector<1x128xf32> to vector<8x128xf32>
    %13 = arith.addf %10, %12 : vector<8x128xf32>
    %c0_13 = arith.constant 0 : index
    %c0_14 = arith.constant 0 : index
    %14 = vector.load %arg6[%c0_13, %c0_14] : memref<8x128xf32, #tpu.memory_space<vmem>>, vector<8x128xf32>
    tpu.vector_store %arg6[%c0_13, %c0_14], %13 {strides = array<i32>} : memref<8x128xf32, #tpu.memory_space<vmem>>, vector<8x128xf32>,
    return
  }
  func.func @transform_0(%arg0: i32) -> (i32, i32) {
    %c0_i32 = arith.constant 0 : i32
    %c0_i32_0 = arith.constant 0 : i32
    return %arg0, %c0_i32 : i32, i32
  }
  func.func @transform_1(%arg0: i32) -> (i32, i32) {
    %c0_i32 = arith.constant 0 : i32
    %c0_i32_0 = arith.constant 0 : i32
    %c0_i32_1 = arith.constant 0 : i32
    return %c0_i32, %c0_i32_0 : i32, i32
  }
  func.func @transform_2(%arg0: i32) -> (i32, i32) {
    %c0_i32 = arith.constant 0 : i32
    %c0_i32_0 = arith.constant 0 : i32
    %c0_i32_1 = arith.constant 0 : i32
    return %c0_i32, %c0_i32_0 : i32, i32
  }
  func.func @transform_3(%arg0: i32) -> (i32, i32) {
    %c0_i32 = arith.constant 0 : i32
    %c0_i32_0 = arith.constant 0 : i32
    %c0_i32_1 = arith.constant 0 : i32
    return %c0_i32, %c0_i32_0 : i32, i32
  }
  func.func @transform_4(%arg0: i32) -> (i32, i32) {
    %c0_i32 = arith.constant 0 : i32
    %c0_i32_0 = arith.constant 0 : i32
    %c0_i32_1 = arith.constant 0 : i32
    return %c0_i32, %c0_i32_0 : i32, i32
  }
  func.func @transform_5(%arg0: i32) -> (i32, i32) {
    %c0_i32 = arith.constant 0 : i32
    %c0_i32_0 = arith.constant 0 : i32
    return %arg0, %c0_i32 : i32, i32
  }
  func.func @transform_6(%arg0: i32) -> (i32, i32) {
    %c0_i32 = arith.constant 0 : i32
    %c0_i32_0 = arith.constant 0 : i32
    return %arg0, %c0_i32 : i32, i32
  }
}

</mosaic_0001>

<llo_original>
// kernel: trailer_text_forward.1
$region0: #{trailer_text_forward.1}
  #allocation0 [shape = 'u32[]', space=smem, size = 0x4, offset = 0x4, fixed_abs, tag = 'smem constant byte address 0x4 - core index']
  #allocation1 [shape = 'u32[144,128]{1,0:T(1,128)}', space=vmem, size = 0x12000, scoped, tag = 'internal scratch']
  %s0 = inlined_call_operand.vmem [shape: f32[8,768], index: 0, kind: input, shape index: {}]
  %s1 = inlined_call_operand.vmem [shape: f32[768,512], index: 1, kind: input, shape index: {}]
  %s2 = inlined_call_operand.vmem [shape: f32[1,512], index: 2, kind: input, shape index: {}]
  %s3 = inlined_call_operand.vmem [shape: f32[512,128], index: 3, kind: input, shape index: {}]
  %s4 = inlined_call_operand.vmem [shape: f32[1,128], index: 4, kind: input, shape index: {}]
  %s5 = inlined_call_operand.vmem [shape: f32[8,128], index: 5, kind: output, shape index: {0}]
  %s6 = inlined_call_operand.hbm [shape: f32[8,512], index: 6, kind: output, shape index: {1}]
  %7 = xla_tuple %s5, %s6
  %s8 = sld [smem:[#allocation0]]
  $region38: #{trailer_text_forward.1} parent=0
    _
  %s10 = ssub.s32 1, %s8
  %s11 = scalar_select 0, %s10, %s8
  $region1: #{trailer_text_forward.1} parent=0
    #allocation2 [shape = 'u8[16384]{0}', space=vmem, size = 0x4000, scoped, tag = 'output window, operand 1, single buffered']
    #allocation3 [shape = 's32[1]{0}', space=sflag, size = 0x4, scoped, tag = 'scoped memory for trailer_text_forward.1']
    %12 = vsyncpa [#allocation3], 0
    // Predicated region
    $region2: #{trailer_text_forward.1} parent=1 // pred_check
      _
    $region3: #{trailer_text_forward.1} parent=1 // pred_check_branch
      %14 = sbr.rel (0) target = $region5
    $region4: #{trailer_text_forward.1} parent=1 // pred_region
      _
    $region5: #{trailer_text_forward.1} parent=1 // pred_fallthru
      _
    // Predicated region
    $region6: #{trailer_text_forward.1} parent=1 // pred_check
      _
    $region7: #{trailer_text_forward.1} parent=1 // pred_check_branch
      %16 = sbr.rel (0) target = $region9
    $region8: #{trailer_text_forward.1} parent=1 // pred_region
      _
    $region9: #{trailer_text_forward.1} parent=1 // pred_fallthru
      _
    // Predicated region
    $region10: #{trailer_text_forward.1} parent=1 // pred_check
      _
    $region11: #{trailer_text_forward.1} parent=1 // pred_check_branch
      %18 = sbr.rel (0) target = $region13
    $region12: #{trailer_text_forward.1} parent=1 // pred_region
      _
    $region13: #{trailer_text_forward.1} parent=1 // pred_fallthru
      _
    // Predicated region
    $region14: #{trailer_text_forward.1} parent=1 // pred_check
      _
    $region15: #{trailer_text_forward.1} parent=1 // pred_check_branch
      %20 = sbr.rel (0) target = $region17
    $region16: #{trailer_text_forward.1} parent=1 // pred_region
      _
    $region17: #{trailer_text_forward.1} parent=1 // pred_fallthru
      _
    // Predicated region
    $region18: #{trailer_text_forward.1} parent=1 // pred_check
      _
    $region19: #{trailer_text_forward.1} parent=1 // pred_check_branch
      %22 = sbr.rel (0) target = $region21
    $region20: #{trailer_text_forward.1} parent=1 // pred_region
      _
    $region21: #{trailer_text_forward.1} parent=1 // pred_fallthru
      _
    %v23 = vld [vmem:[%s0] sm:$0xff]
    %v24 = vld [vmem:[%s0 + $0x8] sm:$0xff]
    %v25 = vld [vmem:[%s0 + $0x10] sm:$0xff]
    %v26 = vld [vmem:[%s0 + $0x18] sm:$0xff]
    %v27 = vld [vmem:[%s0 + $0x20] sm:$0xff]
    %v28 = vld [vmem:[%s0 + $0x28] sm:$0xff]
    %v29 = vld [vmem:[%s1] sm:$0xff]
    %v30 = vld [vmem:[%s1 + $0x8] sm:$0xff]
    %v31 = vld [vmem:[%s1 + $0x10] sm:$0xff]
    %v32 = vld [vmem:[%s1 + $0x18] sm:$0xff]
    %v33 = vld [vmem:[%s1 + $0x20] sm:$0xff]
    %v34 = vld [vmem:[%s1 + $0x28] sm:$0xff]
    %v35 = vld [vmem:[%s1 + $0x30] sm:$0xff]
    %v36 = vld [vmem:[%s1 + $0x38] sm:$0xff]
    %v37 = vld [vmem:[%s1 + $0x40] sm:$0xff]
    %v38 = vld [vmem:[%s1 + $0x48] sm:$0xff]
    %v39 = vld [vmem:[%s1 + $0x50] sm:$0xff]
    %v40 = vld [vmem:[%s1 + $0x58] sm:$0xff]
    %v41 = vld [vmem:[%s1 + $0x60] sm:$0xff]
    %v42 = vld [vmem:[%s1 + $0x68] sm:$0xff]
    %v43 = vld [vmem:[%s1 + $0x70] sm:$0xff]
    %v44 = vld [vmem:[%s1 + $0x78] sm:$0xff]
    %v45 = vld [vmem:[%s1 + $0x80] sm:$0xff]
    %v46 = vld [vmem:[%s1 + $0x88] sm:$0xff]
    %v47 = vld [vmem:[%s1 + $0x90] sm:$0xff]
    %v48 = vld [vmem:[%s1 + $0x98] sm:$0xff]
    %v49 = vld [vmem:[%s1 + $0xa0] sm:$0xff]
    %v50 = vld [vmem:[%s1 + $0xa8] sm:$0xff]
    %v51 = vld [vmem:[%s1 + $0xb0] sm:$0xff]
    %v52 = vld [vmem:[%s1 + $0xb8] sm:$0xff]
    %v53 = vld [vmem:[%s1 + $0xc0] sm:$0xff]
    %v54 = vld [vmem:[%s1 + $0xc8] sm:$0xff]
    %v55 = vld [vmem:[%s1 + $0xd0] sm:$0xff]
    %v56 = vld [vmem:[%s1 + $0xd8] sm:$0xff]
    %v57 = vld [vmem:[%s1 + $0xe0] sm:$0xff]
    %v58 = vld [vmem:[%s1 + $0xe8] sm:$0xff]
    %v59 = vld [vmem:[%s1 + $0xf0] sm:$0xff]
    %v60 = vld [vmem:[%s1 + $0xf8] sm:$0xff]
    %v61 = vld [vmem:[%s1 + $0x100] sm:$0xff]
    %v62 = vld [vmem:[%s1 + $0x108] sm:$0xff]
    %v63 = vld [vmem:[%s1 + $0x110] sm:$0xff]
    %v64 = vld [vmem:[%s1 + $0x118] sm:$0xff]
    %v65 = vld [vmem:[%s1 + $0x120] sm:$0xff]
    %v66 = vld [vmem:[%s1 + $0x128] sm:$0xff]
    %v67 = vld [vmem:[%s1 + $0x130] sm:$0xff]
    %v68 = vld [vmem:[%s1 + $0x138] sm:$0xff]
    %v69 = vld [vmem:[%s1 + $0x140] sm:$0xff]
    %v70 = vld [vmem:[%s1 + $0x148] sm:$0xff]
    %v71 = vld [vmem:[%s1 + $0x150] sm:$0xff]
    %v72 = vld [vmem:[%s1 + $0x158] sm:$0xff]
    %v73 = vld [vmem:[%s1 + $0x160] sm:$0xff]
    %v74 = vld [vmem:[%s1 + $0x168] sm:$0xff]
    %v75 = vld [vmem:[%s1 + $0x170] sm:$0xff]
    %v76 = vld [vmem:[%s1 + $0x178] sm:$0xff]
    %v77 = vld [vmem:[%s1 + $0x180] sm:$0xff]
    %v78 = vld [vmem:[%s1 + $0x188] sm:$0xff]
    %v79 = vld [vmem:[%s1 + $0x190] sm:$0xff]
    %v80 = vld [vmem:[%s1 + $0x198] sm:$0xff]
    %v81 = vld [vmem:[%s1 + $0x1a0] sm:$0xff]
    %v82 = vld [vmem:[%s1 + $0x1a8] sm:$0xff]
    %v83 = vld [vmem:[%s1 + $0x1b0] sm:$0xff]
    %v84 = vld [vmem:[%s1 + $0x1b8] sm:$0xff]
    %v85 = vld [vmem:[%s1 + $0x1c0] sm:$0xff]
    %v86 = vld [vmem:[%s1 + $0x1c8] sm:$0xff]
    %v87 = vld [vmem:[%s1 + $0x1d0] sm:$0xff]
    %v88 = vld [vmem:[%s1 + $0x1d8] sm:$0xff]
    %v89 = vld [vmem:[%s1 + $0x1e0] sm:$0xff]
    %v90 = vld [vmem:[%s1 + $0x1e8] sm:$0xff]
    %v91 = vld [vmem:[%s1 + $0x1f0] sm:$0xff]
    %v92 = vld [vmem:[%s1 + $0x1f8] sm:$0xff]
    %v93 = vld [vmem:[%s1 + $0x200] sm:$0xff]
    %v94 = vld [vmem:[%s1 + $0x208] sm:$0xff]
    %v95 = vld [vmem:[%s1 + $0x210] sm:$0xff]
    %v96 = vld [vmem:[%s1 + $0x218] sm:$0xff]
    %v97 = vld [vmem:[%s1 + $0x220] sm:$0xff]
    %v98 = vld [vmem:[%s1 + $0x228] sm:$0xff]
    %v99 = vld [vmem:[%s1 + $0x230] sm:$0xff]
    %v100 = vld [vmem:[%s1 + $0x238] sm:$0xff]
    %v101 = vld [vmem:[%s1 + $0x240] sm:$0xff]
    %v102 = vld [vmem:[%s1 + $0x248] sm:$0xff]
    %v103 = vld [vmem:[%s1 + $0x250] sm:$0xff]
    %v104 = vld [vmem:[%s1 + $0x258] sm:$0xff]
    %v105 = vld [vmem:[%s1 + $0x260] sm:$0xff]
    %v106 = vld [vmem:[%s1 + $0x268] sm:$0xff]
    %v107 = vld [vmem:[%s1 + $0x270] sm:$0xff]
    %v108 = vld [vmem:[%s1 + $0x278] sm:$0xff]
    %v109 = vld [vmem:[%s1 + $0x280] sm:$0xff]
    %v110 = vld [vmem:[%s1 + $0x288] sm:$0xff]
    %v111 = vld [vmem:[%s1 + $0x290] sm:$0xff]
    %v112 = vld [vmem:[%s1 + $0x298] sm:$0xff]
    %v113 = vld [vmem:[%s1 + $0x2a0] sm:$0xff]
    %v114 = vld [vmem:[%s1 + $0x2a8] sm:$0xff]
    %v115 = vld [vmem:[%s1 + $0x2b0] sm:$0xff]
    %v116 = vld [vmem:[%s1 + $0x2b8] sm:$0xff]
    %v117 = vld [vmem:[%s1 + $0x2c0] sm:$0xff]
    %v118 = vld [vmem:[%s1 + $0x2c8] sm:$0xff]
    %v119 = vld [vmem:[%s1 + $0x2d0] sm:$0xff]
    %v120 = vld [vmem:[%s1 + $0x2d8] sm:$0xff]
    %v121 = vld [vmem:[%s1 + $0x2e0] sm:$0xff]
    %v122 = vld [vmem:[%s1 + $0x2e8] sm:$0xff]
    %v123 = vld [vmem:[%s1 + $0x2f0] sm:$0xff]
    %v124 = vld [vmem:[%s1 + $0x2f8] sm:$0xff]
    %v125 = vld [vmem:[%s1 + $0x300] sm:$0xff]
    %v126 = vld [vmem:[%s1 + $0x308] sm:$0xff]
    %v127 = vld [vmem:[%s1 + $0x310] sm:$0xff]
    %v128 = vld [vmem:[%s1 + $0x318] sm:$0xff]
    %v129 = vld [vmem:[%s1 + $0x320] sm:$0xff]
    %v130 = vld [vmem:[%s1 + $0x328] sm:$0xff]
    %v131 = vld [vmem:[%s1 + $0x330] sm:$0xff]
    %v132 = vld [vmem:[%s1 + $0x338] sm:$0xff]
    %v133 = vld [vmem:[%s1 + $0x340] sm:$0xff]
    %v134 = vld [vmem:[%s1 + $0x348] sm:$0xff]
    %v135 = vld [vmem:[%s1 + $0x350] sm:$0xff]
    %v136 = vld [vmem:[%s1 + $0x358] sm:$0xff]
    %v137 = vld [vmem:[%s1 + $0x360] sm:$0xff]
    %v138 = vld [vmem:[%s1 + $0x368] sm:$0xff]
    %v139 = vld [vmem:[%s1 + $0x370] sm:$0xff]
    %v140 = vld [vmem:[%s1 + $0x378] sm:$0xff]
    %v141 = vld [vmem:[%s1 + $0x380] sm:$0xff]
    %v142 = vld [vmem:[%s1 + $0x388] sm:$0xff]
    %v143 = vld [vmem:[%s1 + $0x390] sm:$0xff]
    %v144 = vld [vmem:[%s1 + $0x398] sm:$0xff]
    %v145 = vld [vmem:[%s1 + $0x3a0] sm:$0xff]
    %v146 = vld [vmem:[%s1 + $0x3a8] sm:$0xff]
    %v147 = vld [vmem:[%s1 + $0x3b0] sm:$0xff]
    %v148 = vld [vmem:[%s1 + $0x3b8] sm:$0xff]
    %v149 = vld [vmem:[%s1 + $0x3c0] sm:$0xff]
    %v150 = vld [vmem:[%s1 + $0x3c8] sm:$0xff]
    %v151 = vld [vmem:[%s1 + $0x3d0] sm:$0xff]
    %v152 = vld [vmem:[%s1 + $0x3d8] sm:$0xff]
    %v153 = vld [vmem:[%s1 + $0x3e0] sm:$0xff]
    %v154 = vld [vmem:[%s1 + $0x3e8] sm:$0xff]
    %v155 = vld [vmem:[%s1 + $0x3f0] sm:$0xff]
    %v156 = vld [vmem:[%s1 + $0x3f8] sm:$0xff]
    %v157 = vld [vmem:[%s1 + $0x400] sm:$0xff]
    %v158 = vld [vmem:[%s1 + $0x408] sm:$0xff]
    %v159 = vld [vmem:[%s1 + $0x410] sm:$0xff]
    %v160 = vld [vmem:[%s1 + $0x418] sm:$0xff]
    %v161 = vld [vmem:[%s1 + $0x420] sm:$0xff]
    %v162 = vld [vmem:[%s1 + $0x428] sm:$0xff]
    %v163 = vld [vmem:[%s1 + $0x430] sm:$0xff]
    %v164 = vld [vmem:[%s1 + $0x438] sm:$0xff]
    %v165 = vld [vmem:[%s1 + $0x440] sm:$0xff]
    %v166 = vld [vmem:[%s1 + $0x448] sm:$0xff]
    %v167 = vld [vmem:[%s1 + $0x450] sm:$0xff]
    %v168 = vld [vmem:[%s1 + $0x458] sm:$0xff]
    %v169 = vld [vmem:[%s1 + $0x460] sm:$0xff]
    %v170 = vld [vmem:[%s1 + $0x468] sm:$0xff]
    %v171 = vld [vmem:[%s1 + $0x470] sm:$0xff]
    %v172 = vld [vmem:[%s1 + $0x478] sm:$0xff]
    %v173 = vld [vmem:[%s1 + $0x480] sm:$0xff]
    %v174 = vld [vmem:[%s1 + $0x488] sm:$0xff]
    %v175 = vld [vmem:[%s1 + $0x490] sm:$0xff]
    %v176 = vld [vmem:[%s1 + $0x498] sm:$0xff]
    %v177 = vld [vmem:[%s1 + $0x4a0] sm:$0xff]
    %v178 = vld [vmem:[%s1 + $0x4a8] sm:$0xff]
    %v179 = vld [vmem:[%s1 + $0x4b0] sm:$0xff]
    %v180 = vld [vmem:[%s1 + $0x4b8] sm:$0xff]
    %v181 = vld [vmem:[%s1 + $0x4c0] sm:$0xff]
    %v182 = vld [vmem:[%s1 + $0x4c8] sm:$0xff]
    %v183 = vld [vmem:[%s1 + $0x4d0] sm:$0xff]
    %v184 = vld [vmem:[%s1 + $0x4d8] sm:$0xff]
    %v185 = vld [vmem:[%s1 + $0x4e0] sm:$0xff]
    %v186 = vld [vmem:[%s1 + $0x4e8] sm:$0xff]
    %v187 = vld [vmem:[%s1 + $0x4f0] sm:$0xff]
    %v188 = vld [vmem:[%s1 + $0x4f8] sm:$0xff]
    %v189 = vld [vmem:[%s1 + $0x500] sm:$0xff]
    %v190 = vld [vmem:[%s1 + $0x508] sm:$0xff]
    %v191 = vld [vmem:[%s1 + $0x510] sm:$0xff]
    %v192 = vld [vmem:[%s1 + $0x518] sm:$0xff]
    %v193 = vld [vmem:[%s1 + $0x520] sm:$0xff]
    %v194 = vld [vmem:[%s1 + $0x528] sm:$0xff]
    %v195 = vld [vmem:[%s1 + $0x530] sm:$0xff]
    %v196 = vld [vmem:[%s1 + $0x538] sm:$0xff]
    %v197 = vld [vmem:[%s1 + $0x540] sm:$0xff]
    %v198 = vld [vmem:[%s1 + $0x548] sm:$0xff]
    %v199 = vld [vmem:[%s1 + $0x550] sm:$0xff]
    %v200 = vld [vmem:[%s1 + $0x558] sm:$0xff]
    %v201 = vld [vmem:[%s1 + $0x560] sm:$0xff]
    %v202 = vld [vmem:[%s1 + $0x568] sm:$0xff]
    %v203 = vld [vmem:[%s1 + $0x570] sm:$0xff]
    %v204 = vld [vmem:[%s1 + $0x578] sm:$0xff]
    %v205 = vld [vmem:[%s1 + $0x580] sm:$0xff]
    %v206 = vld [vmem:[%s1 + $0x588] sm:$0xff]
    %v207 = vld [vmem:[%s1 + $0x590] sm:$0xff]
    %v208 = vld [vmem:[%s1 + $0x598] sm:$0xff]
    %v209 = vld [vmem:[%s1 + $0x5a0] sm:$0xff]
    %v210 = vld [vmem:[%s1 + $0x5a8] sm:$0xff]
    %v211 = vld [vmem:[%s1 + $0x5b0] sm:$0xff]
    %v212 = vld [vmem:[%s1 + $0x5b8] sm:$0xff]
    %v213 = vld [vmem:[%s1 + $0x5c0] sm:$0xff]
    %v214 = vld [vmem:[%s1 + $0x5c8] sm:$0xff]
    %v215 = vld [vmem:[%s1 + $0x5d0] sm:$0xff]
    %v216 = vld [vmem:[%s1 + $0x5d8] sm:$0xff]
    %v217 = vld [vmem:[%s1 + $0x5e0] sm:$0xff]
    %v218 = vld [vmem:[%s1 + $0x5e8] sm:$0xff]
    %v219 = vld [vmem:[%s1 + $0x5f0] sm:$0xff]
    %v220 = vld [vmem:[%s1 + $0x5f8] sm:$0xff]
    %v221 = vld [vmem:[%s1 + $0x600] sm:$0xff]
    %v222 = vld [vmem:[%s1 + $0x608] sm:$0xff]
    %v223 = vld [vmem:[%s1 + $0x610] sm:$0xff]
    %v224 = vld [vmem:[%s1 + $0x618] sm:$0xff]
    %v225 = vld [vmem:[%s1 + $0x620] sm:$0xff]
    %v226 = vld [vmem:[%s1 + $0x628] sm:$0xff]
    %v227 = vld [vmem:[%s1 + $0x630] sm:$0xff]
    %v228 = vld [vmem:[%s1 + $0x638] sm:$0xff]
    %v229 = vld [vmem:[%s1 + $0x640] sm:$0xff]
    %v230 = vld [vmem:[%s1 + $0x648] sm:$0xff]
    %v231 = vld [vmem:[%s1 + $0x650] sm:$0xff]
    %v232 = vld [vmem:[%s1 + $0x658] sm:$0xff]
    %v233 = vld [vmem:[%s1 + $0x660] sm:$0xff]
    %v234 = vld [vmem:[%s1 + $0x668] sm:$0xff]
    %v235 = vld [vmem:[%s1 + $0x670] sm:$0xff]
    %v236 = vld [vmem:[%s1 + $0x678] sm:$0xff]
    %v237 = vld [vmem:[%s1 + $0x680] sm:$0xff]
    %v238 = vld [vmem:[%s1 + $0x688] sm:$0xff]
    %v239 = vld [vmem:[%s1 + $0x690] sm:$0xff]
    %v240 = vld [vmem:[%s1 + $0x698] sm:$0xff]
    %v241 = vld [vmem:[%s1 + $0x6a0] sm:$0xff]
    %v242 = vld [vmem:[%s1 + $0x6a8] sm:$0xff]
    %v243 = vld [vmem:[%s1 + $0x6b0] sm:$0xff]
    %v244 = vld [vmem:[%s1 + $0x6b8] sm:$0xff]
    %v245 = vld [vmem:[%s1 + $0x6c0] sm:$0xff]
    %v246 = vld [vmem:[%s1 + $0x6c8] sm:$0xff]
    %v247 = vld [vmem:[%s1 + $0x6d0] sm:$0xff]
    %v248 = vld [vmem:[%s1 + $0x6d8] sm:$0xff]
    %v249 = vld [vmem:[%s1 + $0x6e0] sm:$0xff]
    %v250 = vld [vmem:[%s1 + $0x6e8] sm:$0xff]
    %v251 = vld [vmem:[%s1 + $0x6f0] sm:$0xff]
    %v252 = vld [vmem:[%s1 + $0x6f8] sm:$0xff]
    %v253 = vld [vmem:[%s1 + $0x700] sm:$0xff]
    %v254 = vld [vmem:[%s1 + $0x708] sm:$0xff]
    %v255 = vld [vmem:[%s1 + $0x710] sm:$0xff]
    %v256 = vld [vmem:[%s1 + $0x718] sm:$0xff]
    %v257 = vld [vmem:[%s1 + $0x720] sm:$0xff]
    %v258 = vld [vmem:[%s1 + $0x728] sm:$0xff]
    %v259 = vld [vmem:[%s1 + $0x730] sm:$0xff]
    %v260 = vld [vmem:[%s1 + $0x738] sm:$0xff]
    %v261 = vld [vmem:[%s1 + $0x740] sm:$0xff]
    %v262 = vld [vmem:[%s1 + $0x748] sm:$0xff]
    %v263 = vld [vmem:[%s1 + $0x750] sm:$0xff]
    %v264 = vld [vmem:[%s1 + $0x758] sm:$0xff]
    %v265 = vld [vmem:[%s1 + $0x760] sm:$0xff]
    %v266 = vld [vmem:[%s1 + $0x768] sm:$0xff]
    %v267 = vld [vmem:[%s1 + $0x770] sm:$0xff]
    %v268 = vld [vmem:[%s1 + $0x778] sm:$0xff]
    %v269 = vld [vmem:[%s1 + $0x780] sm:$0xff]
    %v270 = vld [vmem:[%s1 + $0x788] sm:$0xff]
    %v271 = vld [vmem:[%s1 + $0x790] sm:$0xff]
    %v272 = vld [vmem:[%s1 + $0x798] sm:$0xff]
    %v273 = vld [vmem:[%s1 + $0x7a0] sm:$0xff]
    %v274 = vld [vmem:[%s1 + $0x7a8] sm:$0xff]
    %v275 = vld [vmem:[%s1 + $0x7b0] sm:$0xff]
    %v276 = vld [vmem:[%s1 + $0x7b8] sm:$0xff]
    %v277 = vld [vmem:[%s1 + $0x7c0] sm:$0xff]
    %v278 = vld [vmem:[%s1 + $0x7c8] sm:$0xff]
    %v279 = vld [vmem:[%s1 + $0x7d0] sm:$0xff]
    %v280 = vld [vmem:[%s1 + $0x7d8] sm:$0xff]
    %v281 = vld [vmem:[%s1 + $0x7e0] sm:$0xff]
    %v282 = vld [vmem:[%s1 + $0x7e8] sm:$0xff]
    %v283 = vld [vmem:[%s1 + $0x7f0] sm:$0xff]
    %v284 = vld [vmem:[%s1 + $0x7f8] sm:$0xff]
    %v285 = vld [vmem:[%s1 + $0x800] sm:$0xff]
    %v286 = vld [vmem:[%s1 + $0x808] sm:$0xff]
    %v287 = vld [vmem:[%s1 + $0x810] sm:$0xff]
    %v288 = vld [vmem:[%s1 + $0x818] sm:$0xff]
    %v289 = vld [vmem:[%s1 + $0x820] sm:$0xff]
    %v290 = vld [vmem:[%s1 + $0x828] sm:$0xff]
    %v291 = vld [vmem:[%s1 + $0x830] sm:$0xff]
    %v292 = vld [vmem:[%s1 + $0x838] sm:$0xff]
    %v293 = vld [vmem:[%s1 + $0x840] sm:$0xff]
    %v294 = vld [vmem:[%s1 + $0x848] sm:$0xff]
    %v295 = vld [vmem:[%s1 + $0x850] sm:$0xff]
    %v296 = vld [vmem:[%s1 + $0x858] sm:$0xff]
    %v297 = vld [vmem:[%s1 + $0x860] sm:$0xff]
    %v298 = vld [vmem:[%s1 + $0x868] sm:$0xff]
    %v299 = vld [vmem:[%s1 + $0x870] sm:$0xff]
    %v300 = vld [vmem:[%s1 + $0x878] sm:$0xff]
    %v301 = vld [vmem:[%s1 + $0x880] sm:$0xff]
    %v302 = vld [vmem:[%s1 + $0x888] sm:$0xff]
    %v303 = vld [vmem:[%s1 + $0x890] sm:$0xff]
    %v304 = vld [vmem:[%s1 + $0x898] sm:$0xff]
    %v305 = vld [vmem:[%s1 + $0x8a0] sm:$0xff]
    %v306 = vld [vmem:[%s1 + $0x8a8] sm:$0xff]
    %v307 = vld [vmem:[%s1 + $0x8b0] sm:$0xff]
    %v308 = vld [vmem:[%s1 + $0x8b8] sm:$0xff]
    %v309 = vld [vmem:[%s1 + $0x8c0] sm:$0xff]
    %v310 = vld [vmem:[%s1 + $0x8c8] sm:$0xff]
    %v311 = vld [vmem:[%s1 + $0x8d0] sm:$0xff]
    %v312 = vld [vmem:[%s1 + $0x8d8] sm:$0xff]
    %v313 = vld [vmem:[%s1 + $0x8e0] sm:$0xff]
    %v314 = vld [vmem:[%s1 + $0x8e8] sm:$0xff]
    %v315 = vld [vmem:[%s1 + $0x8f0] sm:$0xff]
    %v316 = vld [vmem:[%s1 + $0x8f8] sm:$0xff]
    %v317 = vld [vmem:[%s1 + $0x900] sm:$0xff]
    %v318 = vld [vmem:[%s1 + $0x908] sm:$0xff]
    %v319 = vld [vmem:[%s1 + $0x910] sm:$0xff]
    %v320 = vld [vmem:[%s1 + $0x918] sm:$0xff]
    %v321 = vld [vmem:[%s1 + $0x920] sm:$0xff]
    %v322 = vld [vmem:[%s1 + $0x928] sm:$0xff]
    %v323 = vld [vmem:[%s1 + $0x930] sm:$0xff]
    %v324 = vld [vmem:[%s1 + $0x938] sm:$0xff]
    %v325 = vld [vmem:[%s1 + $0x940] sm:$0xff]
    %v326 = vld [vmem:[%s1 + $0x948] sm:$0xff]
    %v327 = vld [vmem:[%s1 + $0x950] sm:$0xff]
    %v328 = vld [vmem:[%s1 + $0x958] sm:$0xff]
    %v329 = vld [vmem:[%s1 + $0x960] sm:$0xff]
    %v330 = vld [vmem:[%s1 + $0x968] sm:$0xff]
    %v331 = vld [vmem:[%s1 + $0x970] sm:$0xff]
    %v332 = vld [vmem:[%s1 + $0x978] sm:$0xff]
    %v333 = vld [vmem:[%s1 + $0x980] sm:$0xff]
    %v334 = vld [vmem:[%s1 + $0x988] sm:$0xff]
    %v335 = vld [vmem:[%s1 + $0x990] sm:$0xff]
    %v336 = vld [vmem:[%s1 + $0x998] sm:$0xff]
    %v337 = vld [vmem:[%s1 + $0x9a0] sm:$0xff]
    %v338 = vld [vmem:[%s1 + $0x9a8] sm:$0xff]
    %v339 = vld [vmem:[%s1 + $0x9b0] sm:$0xff]
    %v340 = vld [vmem:[%s1 + $0x9b8] sm:$0xff]
    %v341 = vld [vmem:[%s1 + $0x9c0] sm:$0xff]
    %v342 = vld [vmem:[%s1 + $0x9c8] sm:$0xff]
    %v343 = vld [vmem:[%s1 + $0x9d0] sm:$0xff]
    %v344 = vld [vmem:[%s1 + $0x9d8] sm:$0xff]
    %v345 = vld [vmem:[%s1 + $0x9e0] sm:$0xff]
    %v346 = vld [vmem:[%s1 + $0x9e8] sm:$0xff]
    %v347 = vld [vmem:[%s1 + $0x9f0] sm:$0xff]
    %v348 = vld [vmem:[%s1 + $0x9f8] sm:$0xff]
    %v349 = vld [vmem:[%s1 + $0xa00] sm:$0xff]
    %v350 = vld [vmem:[%s1 + $0xa08] sm:$0xff]
    %v351 = vld [vmem:[%s1 + $0xa10] sm:$0xff]
    %v352 = vld [vmem:[%s1 + $0xa18] sm:$0xff]
    %v353 = vld [vmem:[%s1 + $0xa20] sm:$0xff]
    %v354 = vld [vmem:[%s1 + $0xa28] sm:$0xff]
    %v355 = vld [vmem:[%s1 + $0xa30] sm:$0xff]
    %v356 = vld [vmem:[%s1 + $0xa38] sm:$0xff]
    %v357 = vld [vmem:[%s1 + $0xa40] sm:$0xff]
    %v358 = vld [vmem:[%s1 + $0xa48] sm:$0xff]
    %v359 = vld [vmem:[%s1 + $0xa50] sm:$0xff]
    %v360 = vld [vmem:[%s1 + $0xa58] sm:$0xff]
    %v361 = vld [vmem:[%s1 + $0xa60] sm:$0xff]
    %v362 = vld [vmem:[%s1 + $0xa68] sm:$0xff]
    %v363 = vld [vmem:[%s1 + $0xa70] sm:$0xff]
    %v364 = vld [vmem:[%s1 + $0xa78] sm:$0xff]
    %v365 = vld [vmem:[%s1 + $0xa80] sm:$0xff]
    %v366 = vld [vmem:[%s1 + $0xa88] sm:$0xff]
    %v367 = vld [vmem:[%s1 + $0xa90] sm:$0xff]
    %v368 = vld [vmem:[%s1 + $0xa98] sm:$0xff]
    %v369 = vld [vmem:[%s1 + $0xaa0] sm:$0xff]
    %v370 = vld [vmem:[%s1 + $0xaa8] sm:$0xff]
    %v371 = vld [vmem:[%s1 + $0xab0] sm:$0xff]
    %v372 = vld [vmem:[%s1 + $0xab8] sm:$0xff]
    %v373 = vld [vmem:[%s1 + $0xac0] sm:$0xff]
    %v374 = vld [vmem:[%s1 + $0xac8] sm:$0xff]
    %v375 = vld [vmem:[%s1 + $0xad0] sm:$0xff]
    %v376 = vld [vmem:[%s1 + $0xad8] sm:$0xff]
    %v377 = vld [vmem:[%s1 + $0xae0] sm:$0xff]
    %v378 = vld [vmem:[%s1 + $0xae8] sm:$0xff]
    %v379 = vld [vmem:[%s1 + $0xaf0] sm:$0xff]
    %v380 = vld [vmem:[%s1 + $0xaf8] sm:$0xff]
    %v381 = vld [vmem:[%s1 + $0xb00] sm:$0xff]
    %v382 = vld [vmem:[%s1 + $0xb08] sm:$0xff]
    %v383 = vld [vmem:[%s1 + $0xb10] sm:$0xff]
    %v384 = vld [vmem:[%s1 + $0xb18] sm:$0xff]
    %v385 = vld [vmem:[%s1 + $0xb20] sm:$0xff]
    %v386 = vld [vmem:[%s1 + $0xb28] sm:$0xff]
    %v387 = vld [vmem:[%s1 + $0xb30] sm:$0xff]
    %v388 = vld [vmem:[%s1 + $0xb38] sm:$0xff]
    %v389 = vld [vmem:[%s1 + $0xb40] sm:$0xff]
    %v390 = vld [vmem:[%s1 + $0xb48] sm:$0xff]
    %v391 = vld [vmem:[%s1 + $0xb50] sm:$0xff]
    %v392 = vld [vmem:[%s1 + $0xb58] sm:$0xff]
    %v393 = vld [vmem:[%s1 + $0xb60] sm:$0xff]
    %v394 = vld [vmem:[%s1 + $0xb68] sm:$0xff]
    %v395 = vld [vmem:[%s1 + $0xb70] sm:$0xff]
    %v396 = vld [vmem:[%s1 + $0xb78] sm:$0xff]
    %v397 = vld [vmem:[%s1 + $0xb80] sm:$0xff]
    %v398 = vld [vmem:[%s1 + $0xb88] sm:$0xff]
    %v399 = vld [vmem:[%s1 + $0xb90] sm:$0xff]
    %v400 = vld [vmem:[%s1 + $0xb98] sm:$0xff]
    %v401 = vld [vmem:[%s1 + $0xba0] sm:$0xff]
    %v402 = vld [vmem:[%s1 + $0xba8] sm:$0xff]
    %v403 = vld [vmem:[%s1 + $0xbb0] sm:$0xff]
    %v404 = vld [vmem:[%s1 + $0xbb8] sm:$0xff]
    %v405 = vld [vmem:[%s1 + $0xbc0] sm:$0xff]
    %v406 = vld [vmem:[%s1 + $0xbc8] sm:$0xff]
    %v407 = vld [vmem:[%s1 + $0xbd0] sm:$0xff]
    %v408 = vld [vmem:[%s1 + $0xbd8] sm:$0xff]
    %v409 = vld [vmem:[%s1 + $0xbe0] sm:$0xff]
    %v410 = vld [vmem:[%s1 + $0xbe8] sm:$0xff]
    %v411 = vld [vmem:[%s1 + $0xbf0] sm:$0xff]
    %v412 = vld [vmem:[%s1 + $0xbf8] sm:$0xff]
    %v413 = vld [vmem:[%s2] sm:$0xf]
    %v415 = vlaneseq
    %v416 = vshrl.u32 %v415, 7
    %v417 = vsub.s32 0, %v416
    %v418 = vrot.slane %v413, %v417
    %v419 = vlaneseq
    %v420 = vshrl.u32 %v419, 7
    %v421 = vsub.s32 1, %v420
    %v422 = vrot.slane %v413, %v421
    %v423 = vlaneseq
    %v424 = vshrl.u32 %v423, 7
    %v425 = vsub.s32 2, %v424
    %v426 = vrot.slane %v413, %v425
    %v427 = vlaneseq
    %v428 = vshrl.u32 %v427, 7
    %v429 = vsub.s32 3, %v428
    %v430 = vrot.slane %v413, %v429
    %435 = vmatprep.subr.mxu0 %v30
    %436 = vmatpush1.msra.mxu0 %v29
    %437 = vmatprep.subr.mxu0 %v34
    %438 = vmatpush1.msra.mxu0 %v33
    %439 = vmatprep.subr.mxu0 %v38
    %440 = vmatpush1.msra.mxu0 %v37
    %441 = vmatprep.subr.mxu0 %v42
    %442 = vmatpush1.msra.mxu0 %v41
    %443 = vmatprep.subr.mxu0 %v46
    %444 = vmatpush1.msra.mxu0 %v45
    %445 = vmatprep.subr.mxu0 %v50
    %446 = vmatpush1.msra.mxu0 %v49
    %447 = vmatprep.subr.mxu0 %v54
    %448 = vmatpush1.msra.mxu0 %v53
    %449 = vmatprep.subr.mxu0 %v58
    %450 = vmatpush1.msra.mxu0 %v57
    %451 = vmatprep.subr.mxu0 %v62
    %452 = vmatpush1.msra.mxu0 %v61
    %453 = vmatprep.subr.mxu0 %v66
    %454 = vmatpush1.msra.mxu0 %v65
    %455 = vmatprep.subr.mxu0 %v70
    %456 = vmatpush1.msra.mxu0 %v69
    %457 = vmatprep.subr.mxu0 %v74
    %458 = vmatpush1.msra.mxu0 %v73
    %459 = vmatprep.subr.mxu0 %v78
    %460 = vmatpush1.msra.mxu0 %v77
    %461 = vmatprep.subr.mxu0 %v82
    %462 = vmatpush1.msra.mxu0 %v81
    %463 = vmatprep.subr.mxu0 %v86
    %464 = vmatpush1.msra.mxu0 %v85
    %465 = vmatprep.subr.mxu0 %v90
    %466 = vmatpush1.msra.mxu0 %v89
    %467 = vmatprep.subr.mxu0 %v94
    %468 = vmatpush1.msra.mxu0 %v93
    %469 = vmatprep.subr.mxu0 %v98
    %470 = vmatpush1.msra.mxu0 %v97
    %471 = vmatprep.subr.mxu0 %v102
    %472 = vmatpush1.msra.mxu0 %v101
    %473 = vmatprep.subr.mxu0 %v106
    %474 = vmatpush1.msra.mxu0 %v105
    %475 = vmatprep.subr.mxu0 %v110
    %476 = vmatpush1.msra.mxu0 %v109
    %477 = vmatprep.subr.mxu0 %v114
    %478 = vmatpush1.msra.mxu0 %v113
    %479 = vmatprep.subr.mxu0 %v118
    %480 = vmatpush1.msra.mxu0 %v117
    %481 = vmatprep.subr.mxu0 %v122
    %482 = vmatpush1.msra.mxu0 %v121
    %483 = vmatprep.subr.mxu0 %v126
    %484 = vmatpush1.msra.mxu0 %v125
    %485 = vmatprep.subr.mxu0 %v130
    %486 = vmatpush1.msra.mxu0 %v129
    %487 = vmatprep.subr.mxu0 %v134
    %488 = vmatpush1.msra.mxu0 %v133
    %489 = vmatprep.subr.mxu0 %v138
    %490 = vmatpush1.msra.mxu0 %v137
    %491 = vmatprep.subr.mxu0 %v142
    %492 = vmatpush1.msra.mxu0 %v141
    %493 = vmatprep.subr.mxu0 %v146
    %494 = vmatpush1.msra.mxu0 %v145
    %495 = vmatprep.subr.mxu0 %v150
    %496 = vmatpush1.msra.mxu0 %v149
    %497 = vmatprep.subr.mxu0 %v154
    %498 = vmatpush1.msra.mxu0 %v153
    %499 = vmatprep.mubr.f32.mxu0 %v24
    %500 = vmatmul.mubr.f32.gmra.mrb[0].mxu0 %v23
    %v501 = vpop.f32.mrb[0].mxu0
    %v502 = vadd.f32 %v418, %v501
    %v503 = vpop.f32.mrb[0].mxu0
    %v504 = vadd.f32 %v422, %v503
    %505 = vdwg.mxu0
    %506 = vmatprep.subr.mxu0 %v158
    %507 = vmatpush1.msra.mxu0 %v157
    %508 = vmatprep.subr.mxu0 %v162
    %509 = vmatpush1.msra.mxu0 %v161
    %510 = vmatprep.subr.mxu0 %v166
    %511 = vmatpush1.msra.mxu0 %v165
    %512 = vmatprep.subr.mxu0 %v170
    %513 = vmatpush1.msra.mxu0 %v169
    %514 = vmatprep.subr.mxu0 %v174
    %515 = vmatpush1.msra.mxu0 %v173
    %516 = vmatprep.subr.mxu0 %v178
    %517 = vmatpush1.msra.mxu0 %v177
    %518 = vmatprep.subr.mxu0 %v182
    %519 = vmatpush1.msra.mxu0 %v181
    %520 = vmatprep.subr.mxu0 %v186
    %521 = vmatpush1.msra.mxu0 %v185
    %522 = vmatprep.subr.mxu0 %v190
    %523 = vmatpush1.msra.mxu0 %v189
    %524 = vmatprep.subr.mxu0 %v194
    %525 = vmatpush1.msra.mxu0 %v193
    %526 = vmatprep.subr.mxu0 %v198
    %527 = vmatpush1.msra.mxu0 %v197
    %528 = vmatprep.subr.mxu0 %v202
    %529 = vmatpush1.msra.mxu0 %v201
    %530 = vmatprep.subr.mxu0 %v206
    %531 = vmatpush1.msra.mxu0 %v205
    %532 = vmatprep.subr.mxu0 %v210
    %533 = vmatpush1.msra.mxu0 %v209
    %534 = vmatprep.subr.mxu0 %v214
    %535 = vmatpush1.msra.mxu0 %v213
    %536 = vmatprep.subr.mxu0 %v218
    %537 = vmatpush1.msra.mxu0 %v217
    %538 = vmatprep.subr.mxu0 %v222
    %539 = vmatpush1.msra.mxu0 %v221
    %540 = vmatprep.subr.mxu0 %v226
    %541 = vmatpush1.msra.mxu0 %v225
    %542 = vmatprep.subr.mxu0 %v230
    %543 = vmatpush1.msra.mxu0 %v229
    %544 = vmatprep.subr.mxu0 %v234
    %545 = vmatpush1.msra.mxu0 %v233
    %546 = vmatprep.subr.mxu0 %v238
    %547 = vmatpush1.msra.mxu0 %v237
    %548 = vmatprep.subr.mxu0 %v242
    %549 = vmatpush1.msra.mxu0 %v241
    %550 = vmatprep.subr.mxu0 %v246
    %551 = vmatpush1.msra.mxu0 %v245
    %552 = vmatprep.subr.mxu0 %v250
    %553 = vmatpush1.msra.mxu0 %v249
    %554 = vmatprep.subr.mxu0 %v254
    %555 = vmatpush1.msra.mxu0 %v253
    %556 = vmatprep.subr.mxu0 %v258
    %557 = vmatpush1.msra.mxu0 %v257
    %558 = vmatprep.subr.mxu0 %v262
    %559 = vmatpush1.msra.mxu0 %v261
    %560 = vmatprep.subr.mxu0 %v266
    %561 = vmatpush1.msra.mxu0 %v265
    %562 = vmatprep.subr.mxu0 %v270
    %563 = vmatpush1.msra.mxu0 %v269
    %564 = vmatprep.subr.mxu0 %v274
    %565 = vmatpush1.msra.mxu0 %v273
    %566 = vmatprep.subr.mxu0 %v278
    %567 = vmatpush1.msra.mxu0 %v277
    %568 = vmatprep.subr.mxu0 %v282
    %569 = vmatpush1.msra.mxu0 %v281
    %570 = vmatprep.mubr.f32.mxu0 %v26
    %571 = vmatmul.mubr.f32.gmra.mrb[0].mxu0 %v25
    %v572 = vpop.f32.mrb[0].mxu0
    %v573 = vadd.f32 %v502, %v572
    %v574 = vpop.f32.mrb[0].mxu0
    %v575 = vadd.f32 %v504, %v574
    %576 = vdwg.mxu0
    %577 = vmatprep.subr.mxu0 %v286
    %578 = vmatpush1.msra.mxu0 %v285
    %579 = vmatprep.subr.mxu0 %v290
    %580 = vmatpush1.msra.mxu0 %v289
    %581 = vmatprep.subr.mxu0 %v294
    %582 = vmatpush1.msra.mxu0 %v293
    %583 = vmatprep.subr.mxu0 %v298
    %584 = vmatpush1.msra.mxu0 %v297
    %585 = vmatprep.subr.mxu0 %v302
    %586 = vmatpush1.msra.mxu0 %v301
    %587 = vmatprep.subr.mxu0 %v306
    %588 = vmatpush1.msra.mxu0 %v305
    %589 = vmatprep.subr.mxu0 %v310
    %590 = vmatpush1.msra.mxu0 %v309
    %591 = vmatprep.subr.mxu0 %v314
    %592 = vmatpush1.msra.mxu0 %v313
    %593 = vmatprep.subr.mxu0 %v318
    %594 = vmatpush1.msra.mxu0 %v317
    %595 = vmatprep.subr.mxu0 %v322
    %596 = vmatpush1.msra.mxu0 %v321
    %597 = vmatprep.subr.mxu0 %v326
    %598 = vmatpush1.msra.mxu0 %v325
    %599 = vmatprep.subr.mxu0 %v330
    %600 = vmatpush1.msra.mxu0 %v329
    %601 = vmatprep.subr.mxu0 %v334
    %602 = vmatpush1.msra.mxu0 %v333
    %603 = vmatprep.subr.mxu0 %v338
    %604 = vmatpush1.msra.mxu0 %v337
    %605 = vmatprep.subr.mxu0 %v342
    %606 = vmatpush1.msra.mxu0 %v341
    %607 = vmatprep.subr.mxu0 %v346
    %608 = vmatpush1.msra.mxu0 %v345
    %609 = vmatprep.subr.mxu0 %v350
    %610 = vmatpush1.msra.mxu0 %v349
    %611 = vmatprep.subr.mxu0 %v354
    %612 = vmatpush1.msra.mxu0 %v353
    %613 = vmatprep.subr.mxu0 %v358
    %614 = vmatpush1.msra.mxu0 %v357
    %615 = vmatprep.subr.mxu0 %v362
    %616 = vmatpush1.msra.mxu0 %v361
    %617 = vmatprep.subr.mxu0 %v366
    %618 = vmatpush1.msra.mxu0 %v365
    %619 = vmatprep.subr.mxu0 %v370
    %620 = vmatpush1.msra.mxu0 %v369
    %621 = vmatprep.subr.mxu0 %v374
    %622 = vmatpush1.msra.mxu0 %v373
    %623 = vmatprep.subr.mxu0 %v378
    %624 = vmatpush1.msra.mxu0 %v377
    %625 = vmatprep.subr.mxu0 %v382
    %626 = vmatpush1.msra.mxu0 %v381
    %627 = vmatprep.subr.mxu0 %v386
    %628 = vmatpush1.msra.mxu0 %v385
    %629 = vmatprep.subr.mxu0 %v390
    %630 = vmatpush1.msra.mxu0 %v389
    %631 = vmatprep.subr.mxu0 %v394
    %632 = vmatpush1.msra.mxu0 %v393
    %633 = vmatprep.subr.mxu0 %v398
    %634 = vmatpush1.msra.mxu0 %v397
    %635 = vmatprep.subr.mxu0 %v402
    %636 = vmatpush1.msra.mxu0 %v401
    %637 = vmatprep.subr.mxu0 %v406
    %638 = vmatpush1.msra.mxu0 %v405
    %639 = vmatprep.subr.mxu0 %v410
    %640 = vmatpush1.msra.mxu0 %v409
    %641 = vmatprep.mubr.f32.mxu0 %v28
    %642 = vmatmul.mubr.f32.gmra.mrb[0].mxu0 %v27
    %v643 = vpop.f32.mrb[0].mxu0
    %v644 = vadd.f32 %v573, %v643
    %v645 = vpop.f32.mrb[0].mxu0
    %v646 = vadd.f32 %v575, %v645
    %647 = vdwg.mxu0
    %648 = vmatprep.subr.mxu0 %v32
    %649 = vmatpush1.msra.mxu0 %v31
    %650 = vmatprep.subr.mxu0 %v36
    %651 = vmatpush1.msra.mxu0 %v35
    %652 = vmatprep.subr.mxu0 %v40
    %653 = vmatpush1.msra.mxu0 %v39
    %654 = vmatprep.subr.mxu0 %v44
    %655 = vmatpush1.msra.mxu0 %v43
    %656 = vmatprep.subr.mxu0 %v48
    %657 = vmatpush1.msra.mxu0 %v47
    %658 = vmatprep.subr.mxu0 %v52
    %659 = vmatpush1.msra.mxu0 %v51
    %660 = vmatprep.subr.mxu0 %v56
    %661 = vmatpush1.msra.mxu0 %v55
    %662 = vmatprep.subr.mxu0 %v60
    %663 = vmatpush1.msra.mxu0 %v59
    %664 = vmatprep.subr.mxu0 %v64
    %665 = vmatpush1.msra.mxu0 %v63
    %666 = vmatprep.subr.mxu0 %v68
    %667 = vmatpush1.msra.mxu0 %v67
    %668 = vmatprep.subr.mxu0 %v72
    %669 = vmatpush1.msra.mxu0 %v71
    %670 = vmatprep.subr.mxu0 %v76
    %671 = vmatpush1.msra.mxu0 %v75
    %672 = vmatprep.subr.mxu0 %v80
    %673 = vmatpush1.msra.mxu0 %v79
    %674 = vmatprep.subr.mxu0 %v84
    %675 = vmatpush1.msra.mxu0 %v83
    %676 = vmatprep.subr.mxu0 %v88
    %677 = vmatpush1.msra.mxu0 %v87
    %678 = vmatprep.subr.mxu0 %v92
    %679 = vmatpush1.msra.mxu0 %v91
    %680 = vmatprep.subr.mxu0 %v96
    %681 = vmatpush1.msra.mxu0 %v95
    %682 = vmatprep.subr.mxu0 %v100
    %683 = vmatpush1.msra.mxu0 %v99
    %684 = vmatprep.subr.mxu0 %v104
    %685 = vmatpush1.msra.mxu0 %v103
    %686 = vmatprep.subr.mxu0 %v108
    %687 = vmatpush1.msra.mxu0 %v107
    %688 = vmatprep.subr.mxu0 %v112
    %689 = vmatpush1.msra.mxu0 %v111
    %690 = vmatprep.subr.mxu0 %v116
    %691 = vmatpush1.msra.mxu0 %v115
    %692 = vmatprep.subr.mxu0 %v120
    %693 = vmatpush1.msra.mxu0 %v119
    %694 = vmatprep.subr.mxu0 %v124
    %695 = vmatpush1.msra.mxu0 %v123
    %696 = vmatprep.subr.mxu0 %v128
    %697 = vmatpush1.msra.mxu0 %v127
    %698 = vmatprep.subr.mxu0 %v132
    %699 = vmatpush1.msra.mxu0 %v131
    %700 = vmatprep.subr.mxu0 %v136
    %701 = vmatpush1.msra.mxu0 %v135
    %702 = vmatprep.subr.mxu0 %v140
    %703 = vmatpush1.msra.mxu0 %v139
    %704 = vmatprep.subr.mxu0 %v144
    %705 = vmatpush1.msra.mxu0 %v143
    %706 = vmatprep.subr.mxu0 %v148
    %707 = vmatpush1.msra.mxu0 %v147
    %708 = vmatprep.subr.mxu0 %v152
    %709 = vmatpush1.msra.mxu0 %v151
    %710 = vmatprep.subr.mxu0 %v156
    %711 = vmatpush1.msra.mxu0 %v155
    %712 = vmatprep.mubr.f32.mxu0 %v24
    %713 = vmatmul.mubr.f32.gmra.mrb[0].mxu0 %v23
    %v714 = vpop.f32.mrb[0].mxu0
    %v715 = vadd.f32 %v426, %v714
    %v716 = vpop.f32.mrb[0].mxu0
    %v717 = vadd.f32 %v430, %v716
    %718 = vdwg.mxu0
    %719 = vmatprep.subr.mxu0 %v160
    %720 = vmatpush1.msra.mxu0 %v159
    %721 = vmatprep.subr.mxu0 %v164
    %722 = vmatpush1.msra.mxu0 %v163
    %723 = vmatprep.subr.mxu0 %v168
    %724 = vmatpush1.msra.mxu0 %v167
    %725 = vmatprep.subr.mxu0 %v172
    %726 = vmatpush1.msra.mxu0 %v171
    %727 = vmatprep.subr.mxu0 %v176
    %728 = vmatpush1.msra.mxu0 %v175
    %729 = vmatprep.subr.mxu0 %v180
    %730 = vmatpush1.msra.mxu0 %v179
    %731 = vmatprep.subr.mxu0 %v184
    %732 = vmatpush1.msra.mxu0 %v183
    %733 = vmatprep.subr.mxu0 %v188
    %734 = vmatpush1.msra.mxu0 %v187
    %735 = vmatprep.subr.mxu0 %v192
    %736 = vmatpush1.msra.mxu0 %v191
    %737 = vmatprep.subr.mxu0 %v196
    %738 = vmatpush1.msra.mxu0 %v195
    %739 = vmatprep.subr.mxu0 %v200
    %740 = vmatpush1.msra.mxu0 %v199
    %741 = vmatprep.subr.mxu0 %v204
    %742 = vmatpush1.msra.mxu0 %v203
    %743 = vmatprep.subr.mxu0 %v208
    %744 = vmatpush1.msra.mxu0 %v207
    %745 = vmatprep.subr.mxu0 %v212
    %746 = vmatpush1.msra.mxu0 %v211
    %747 = vmatprep.subr.mxu0 %v216
    %748 = vmatpush1.msra.mxu0 %v215
    %749 = vmatprep.subr.mxu0 %v220
    %750 = vmatpush1.msra.mxu0 %v219
    %751 = vmatprep.subr.mxu0 %v224
    %752 = vmatpush1.msra.mxu0 %v223
    %753 = vmatprep.subr.mxu0 %v228
    %754 = vmatpush1.msra.mxu0 %v227
    %755 = vmatprep.subr.mxu0 %v232
    %756 = vmatpush1.msra.mxu0 %v231
    %757 = vmatprep.subr.mxu0 %v236
    %758 = vmatpush1.msra.mxu0 %v235
    %759 = vmatprep.subr.mxu0 %v240
    %760 = vmatpush1.msra.mxu0 %v239
    %761 = vmatprep.subr.mxu0 %v244
    %762 = vmatpush1.msra.mxu0 %v243
    %763 = vmatprep.subr.mxu0 %v248
    %764 = vmatpush1.msra.mxu0 %v247
    %765 = vmatprep.subr.mxu0 %v252
    %766 = vmatpush1.msra.mxu0 %v251
    %767 = vmatprep.subr.mxu0 %v256
    %768 = vmatpush1.msra.mxu0 %v255
    %769 = vmatprep.subr.mxu0 %v260
    %770 = vmatpush1.msra.mxu0 %v259
    %771 = vmatprep.subr.mxu0 %v264
    %772 = vmatpush1.msra.mxu0 %v263
    %773 = vmatprep.subr.mxu0 %v268
    %774 = vmatpush1.msra.mxu0 %v267
    %775 = vmatprep.subr.mxu0 %v272
    %776 = vmatpush1.msra.mxu0 %v271
    %777 = vmatprep.subr.mxu0 %v276
    %778 = vmatpush1.msra.mxu0 %v275
    %779 = vmatprep.subr.mxu0 %v280
    %780 = vmatpush1.msra.mxu0 %v279
    %781 = vmatprep.subr.mxu0 %v284
    %782 = vmatpush1.msra.mxu0 %v283
    %783 = vmatprep.mubr.f32.mxu0 %v26
    %784 = vmatmul.mubr.f32.gmra.mrb[0].mxu0 %v25
    %v785 = vpop.f32.mrb[0].mxu0
    %v786 = vadd.f32 %v715, %v785
    %v787 = vpop.f32.mrb[0].mxu0
    %v788 = vadd.f32 %v717, %v787
    %789 = vdwg.mxu0
    %790 = vmatprep.subr.mxu0 %v288
    %791 = vmatpush1.msra.mxu0 %v287
    %792 = vmatprep.subr.mxu0 %v292
    %793 = vmatpush1.msra.mxu0 %v291
    %794 = vmatprep.subr.mxu0 %v296
    %795 = vmatpush1.msra.mxu0 %v295
    %796 = vmatprep.subr.mxu0 %v300
    %797 = vmatpush1.msra.mxu0 %v299
    %798 = vmatprep.subr.mxu0 %v304
    %799 = vmatpush1.msra.mxu0 %v303
    %800 = vmatprep.subr.mxu0 %v308
    %801 = vmatpush1.msra.mxu0 %v307
    %802 = vmatprep.subr.mxu0 %v312
    %803 = vmatpush1.msra.mxu0 %v311
    %804 = vmatprep.subr.mxu0 %v316
    %805 = vmatpush1.msra.mxu0 %v315
    %806 = vmatprep.subr.mxu0 %v320
    %807 = vmatpush1.msra.mxu0 %v319
    %808 = vmatprep.subr.mxu0 %v324
    %809 = vmatpush1.msra.mxu0 %v323
    %810 = vmatprep.subr.mxu0 %v328
    %811 = vmatpush1.msra.mxu0 %v327
    %812 = vmatprep.subr.mxu0 %v332
    %813 = vmatpush1.msra.mxu0 %v331
    %814 = vmatprep.subr.mxu0 %v336
    %815 = vmatpush1.msra.mxu0 %v335
    %816 = vmatprep.subr.mxu0 %v340
    %817 = vmatpush1.msra.mxu0 %v339
    %818 = vmatprep.subr.mxu0 %v344
    %819 = vmatpush1.msra.mxu0 %v343
    %820 = vmatprep.subr.mxu0 %v348
    %821 = vmatpush1.msra.mxu0 %v347
    %822 = vmatprep.subr.mxu0 %v352
    %823 = vmatpush1.msra.mxu0 %v351
    %824 = vmatprep.subr.mxu0 %v356
    %825 = vmatpush1.msra.mxu0 %v355
    %826 = vmatprep.subr.mxu0 %v360
    %827 = vmatpush1.msra.mxu0 %v359
    %828 = vmatprep.subr.mxu0 %v364
    %829 = vmatpush1.msra.mxu0 %v363
    %830 = vmatprep.subr.mxu0 %v368
    %831 = vmatpush1.msra.mxu0 %v367
    %832 = vmatprep.subr.mxu0 %v372
    %833 = vmatpush1.msra.mxu0 %v371
    %834 = vmatprep.subr.mxu0 %v376
    %835 = vmatpush1.msra.mxu0 %v375
    %836 = vmatprep.subr.mxu0 %v380
    %837 = vmatpush1.msra.mxu0 %v379
    %838 = vmatprep.subr.mxu0 %v384
    %839 = vmatpush1.msra.mxu0 %v383
    %840 = vmatprep.subr.mxu0 %v388
    %841 = vmatpush1.msra.mxu0 %v387
    %842 = vmatprep.subr.mxu0 %v392
    %843 = vmatpush1.msra.mxu0 %v391
    %844 = vmatprep.subr.mxu0 %v396
    %845 = vmatpush1.msra.mxu0 %v395
    %846 = vmatprep.subr.mxu0 %v400
    %847 = vmatpush1.msra.mxu0 %v399
    %848 = vmatprep.subr.mxu0 %v404
    %849 = vmatpush1.msra.mxu0 %v403
    %850 = vmatprep.subr.mxu0 %v408
    %851 = vmatpush1.msra.mxu0 %v407
    %852 = vmatprep.subr.mxu0 %v412
    %853 = vmatpush1.msra.mxu0 %v411
    %854 = vmatprep.mubr.f32.mxu0 %v28
    %855 = vmatmul.mubr.f32.gmra.mrb[0].mxu0 %v27
    %v856 = vpop.f32.mrb[0].mxu0
    %v857 = vadd.f32 %v786, %v856
    %v858 = vpop.f32.mrb[0].mxu0
    %v859 = vadd.f32 %v788, %v858
    %860 = vdwg.mxu0
    %v861 = vmax.f32 %v644, 0.0
    %v862 = vmax.f32 %v646, 0.0
    %v863 = vmax.f32 %v857, 0.0
    %v864 = vmax.f32 %v859, 0.0
    %865 = vst [vmem:[#allocation2] sm:$0xff] %v861
    %866 = vst [vmem:[#allocation2 + $0x8] sm:$0xff] %v862
    %867 = vst [vmem:[#allocation2 + $0x10] sm:$0xff] %v863
    %868 = vst [vmem:[#allocation2 + $0x18] sm:$0xff] %v864
    %v869 = vld [vmem:[%s3] sm:$0xff]
    %v870 = vld [vmem:[%s3 + $0x8] sm:$0xff]
    %v871 = vld [vmem:[%s3 + $0x10] sm:$0xff]
    %v872 = vld [vmem:[%s3 + $0x18] sm:$0xff]
    %v873 = vld [vmem:[%s3 + $0x20] sm:$0xff]
    %v874 = vld [vmem:[%s3 + $0x28] sm:$0xff]
    %v875 = vld [vmem:[%s3 + $0x30] sm:$0xff]
    %v876 = vld [vmem:[%s3 + $0x38] sm:$0xff]
    %v877 = vld [vmem:[%s3 + $0x40] sm:$0xff]
    %v878 = vld [vmem:[%s3 + $0x48] sm:$0xff]
    %v879 = vld [vmem:[%s3 + $0x50] sm:$0xff]
    %v880 = vld [vmem:[%s3 + $0x58] sm:$0xff]
    %v881 = vld [vmem:[%s3 + $0x60] sm:$0xff]
    %v882 = vld [vmem:[%s3 + $0x68] sm:$0xff]
    %v883 = vld [vmem:[%s3 + $0x70] sm:$0xff]
    %v884 = vld [vmem:[%s3 + $0x78] sm:$0xff]
    %v885 = vld [vmem:[%s3 + $0x80] sm:$0xff]
    %v886 = vld [vmem:[%s3 + $0x88] sm:$0xff]
    %v887 = vld [vmem:[%s3 + $0x90] sm:$0xff]
    %v888 = vld [vmem:[%s3 + $0x98] sm:$0xff]
    %v889 = vld [vmem:[%s3 + $0xa0] sm:$0xff]
    %v890 = vld [vmem:[%s3 + $0xa8] sm:$0xff]
    %v891 = vld [vmem:[%s3 + $0xb0] sm:$0xff]
    %v892 = vld [vmem:[%s3 + $0xb8] sm:$0xff]
    %v893 = vld [vmem:[%s3 + $0xc0] sm:$0xff]
    %v894 = vld [vmem:[%s3 + $0xc8] sm:$0xff]
    %v895 = vld [vmem:[%s3 + $0xd0] sm:$0xff]
    %v896 = vld [vmem:[%s3 + $0xd8] sm:$0xff]
    %v897 = vld [vmem:[%s3 + $0xe0] sm:$0xff]
    %v898 = vld [vmem:[%s3 + $0xe8] sm:$0xff]
    %v899 = vld [vmem:[%s3 + $0xf0] sm:$0xff]
    %v900 = vld [vmem:[%s3 + $0xf8] sm:$0xff]
    %v901 = vld [vmem:[%s3 + $0x100] sm:$0xff]
    %v902 = vld [vmem:[%s3 + $0x108] sm:$0xff]
    %v903 = vld [vmem:[%s3 + $0x110] sm:$0xff]
    %v904 = vld [vmem:[%s3 + $0x118] sm:$0xff]
    %v905 = vld [vmem:[%s3 + $0x120] sm:$0xff]
    %v906 = vld [vmem:[%s3 + $0x128] sm:$0xff]
    %v907 = vld [vmem:[%s3 + $0x130] sm:$0xff]
    %v908 = vld [vmem:[%s3 + $0x138] sm:$0xff]
    %v909 = vld [vmem:[%s3 + $0x140] sm:$0xff]
    %v910 = vld [vmem:[%s3 + $0x148] sm:$0xff]
    %v911 = vld [vmem:[%s3 + $0x150] sm:$0xff]
    %v912 = vld [vmem:[%s3 + $0x158] sm:$0xff]
    %v913 = vld [vmem:[%s3 + $0x160] sm:$0xff]
    %v914 = vld [vmem:[%s3 + $0x168] sm:$0xff]
    %v915 = vld [vmem:[%s3 + $0x170] sm:$0xff]
    %v916 = vld [vmem:[%s3 + $0x178] sm:$0xff]
    %v917 = vld [vmem:[%s3 + $0x180] sm:$0xff]
    %v918 = vld [vmem:[%s3 + $0x188] sm:$0xff]
    %v919 = vld [vmem:[%s3 + $0x190] sm:$0xff]
    %v920 = vld [vmem:[%s3 + $0x198] sm:$0xff]
    %v921 = vld [vmem:[%s3 + $0x1a0] sm:$0xff]
    %v922 = vld [vmem:[%s3 + $0x1a8] sm:$0xff]
    %v923 = vld [vmem:[%s3 + $0x1b0] sm:$0xff]
    %v924 = vld [vmem:[%s3 + $0x1b8] sm:$0xff]
    %v925 = vld [vmem:[%s3 + $0x1c0] sm:$0xff]
    %v926 = vld [vmem:[%s3 + $0x1c8] sm:$0xff]
    %v927 = vld [vmem:[%s3 + $0x1d0] sm:$0xff]
    %v928 = vld [vmem:[%s3 + $0x1d8] sm:$0xff]
    %v929 = vld [vmem:[%s3 + $0x1e0] sm:$0xff]
    %v930 = vld [vmem:[%s3 + $0x1e8] sm:$0xff]
    %v931 = vld [vmem:[%s3 + $0x1f0] sm:$0xff]
    %v932 = vld [vmem:[%s3 + $0x1f8] sm:$0xff]
    %v933 = vld [vmem:[%s4] sm:$0x1]
    %v935 = vlaneseq
    %v936 = vshrl.u32 %v935, 7
    %v937 = vsub.s32 0, %v936
    %v938 = vrot.slane %v933, %v937
    %940 = vmatprep.subr.mxu0 0.0
    %941 = vmatpush1.msra.mxu0 %v869
    %942 = vmatprep.subr.mxu0 0.0
    %943 = vmatpush1.msra.mxu0 %v870
    %944 = vmatprep.subr.mxu0 0.0
    %945 = vmatpush1.msra.mxu0 %v871
    %946 = vmatprep.subr.mxu0 0.0
    %947 = vmatpush1.msra.mxu0 %v872
    %948 = vmatprep.subr.mxu0 0.0
    %949 = vmatpush1.msra.mxu0 %v873
    %950 = vmatprep.subr.mxu0 0.0
    %951 = vmatpush1.msra.mxu0 %v874
    %952 = vmatprep.subr.mxu0 0.0
    %953 = vmatpush1.msra.mxu0 %v875
    %954 = vmatprep.subr.mxu0 0.0
    %955 = vmatpush1.msra.mxu0 %v876
    %956 = vmatprep.subr.mxu0 0.0
    %957 = vmatpush1.msra.mxu0 %v877
    %958 = vmatprep.subr.mxu0 0.0
    %959 = vmatpush1.msra.mxu0 %v878
    %960 = vmatprep.subr.mxu0 0.0
    %961 = vmatpush1.msra.mxu0 %v879
    %962 = vmatprep.subr.mxu0 0.0
    %963 = vmatpush1.msra.mxu0 %v880
    %964 = vmatprep.subr.mxu0 0.0
    %965 = vmatpush1.msra.mxu0 %v881
    %966 = vmatprep.subr.mxu0 0.0
    %967 = vmatpush1.msra.mxu0 %v882
    %968 = vmatprep.subr.mxu0 0.0
    %969 = vmatpush1.msra.mxu0 %v883
    %970 = vmatprep.subr.mxu0 0.0
    %971 = vmatpush1.msra.mxu0 %v884
    %972 = vmatprep.subr.mxu0 0.0
    %973 = vmatpush1.msra.mxu0 %v885
    %974 = vmatprep.subr.mxu0 0.0
    %975 = vmatpush1.msra.mxu0 %v886
    %976 = vmatprep.subr.mxu0 0.0
    %977 = vmatpush1.msra.mxu0 %v887
    %978 = vmatprep.subr.mxu0 0.0
    %979 = vmatpush1.msra.mxu0 %v888
    %980 = vmatprep.subr.mxu0 0.0
    %981 = vmatpush1.msra.mxu0 %v889
    %982 = vmatprep.subr.mxu0 0.0
    %983 = vmatpush1.msra.mxu0 %v890
    %984 = vmatprep.subr.mxu0 0.0
    %985 = vmatpush1.msra.mxu0 %v891
    %986 = vmatprep.subr.mxu0 0.0
    %987 = vmatpush1.msra.mxu0 %v892
    %988 = vmatprep.subr.mxu0 0.0
    %989 = vmatpush1.msra.mxu0 %v893
    %990 = vmatprep.subr.mxu0 0.0
    %991 = vmatpush1.msra.mxu0 %v894
    %992 = vmatprep.subr.mxu0 0.0
    %993 = vmatpush1.msra.mxu0 %v895
    %994 = vmatprep.subr.mxu0 0.0
    %995 = vmatpush1.msra.mxu0 %v896
    %996 = vmatprep.subr.mxu0 0.0
    %997 = vmatpush1.msra.mxu0 %v897
    %998 = vmatprep.subr.mxu0 0.0
    %999 = vmatpush1.msra.mxu0 %v898
    %1000 = vmatprep.subr.mxu0 0.0
    %1001 = vmatpush1.msra.mxu0 %v899
    %1002 = vmatprep.subr.mxu0 0.0
    %1003 = vmatpush1.msra.mxu0 %v900
    %1004 = vmatprep.mubr.f32.mxu0 %v862
    %1005 = vmatmul.mubr.f32.gmra.mrb[0].mxu0 %v861
    %v1006 = vpop.f32.mrb[0].mxu0
    %v1007 = vadd.f32 %v938, %v1006
    %v1008 = vpop.f32.mrb[0].mxu0
    %1009 = vdwg.mxu0
    %1010 = vmatprep.subr.mxu0 0.0
    %1011 = vmatpush1.msra.mxu0 %v901
    %1012 = vmatprep.subr.mxu0 0.0
    %1013 = vmatpush1.msra.mxu0 %v902
    %1014 = vmatprep.subr.mxu0 0.0
    %1015 = vmatpush1.msra.mxu0 %v903
    %1016 = vmatprep.subr.mxu0 0.0
    %1017 = vmatpush1.msra.mxu0 %v904
    %1018 = vmatprep.subr.mxu0 0.0
    %1019 = vmatpush1.msra.mxu0 %v905
    %1020 = vmatprep.subr.mxu0 0.0
    %1021 = vmatpush1.msra.mxu0 %v906
    %1022 = vmatprep.subr.mxu0 0.0
    %1023 = vmatpush1.msra.mxu0 %v907
    %1024 = vmatprep.subr.mxu0 0.0
    %1025 = vmatpush1.msra.mxu0 %v908
    %1026 = vmatprep.subr.mxu0 0.0
    %1027 = vmatpush1.msra.mxu0 %v909
    %1028 = vmatprep.subr.mxu0 0.0
    %1029 = vmatpush1.msra.mxu0 %v910
    %1030 = vmatprep.subr.mxu0 0.0
    %1031 = vmatpush1.msra.mxu0 %v911
    %1032 = vmatprep.subr.mxu0 0.0
    %1033 = vmatpush1.msra.mxu0 %v912
    %1034 = vmatprep.subr.mxu0 0.0
    %1035 = vmatpush1.msra.mxu0 %v913
    %1036 = vmatprep.subr.mxu0 0.0
    %1037 = vmatpush1.msra.mxu0 %v914
    %1038 = vmatprep.subr.mxu0 0.0
    %1039 = vmatpush1.msra.mxu0 %v915
    %1040 = vmatprep.subr.mxu0 0.0
    %1041 = vmatpush1.msra.mxu0 %v916
    %1042 = vmatprep.subr.mxu0 0.0
    %1043 = vmatpush1.msra.mxu0 %v917
    %1044 = vmatprep.subr.mxu0 0.0
    %1045 = vmatpush1.msra.mxu0 %v918
    %1046 = vmatprep.subr.mxu0 0.0
    %1047 = vmatpush1.msra.mxu0 %v919
    %1048 = vmatprep.subr.mxu0 0.0
    %1049 = vmatpush1.msra.mxu0 %v920
    %1050 = vmatprep.subr.mxu0 0.0
    %1051 = vmatpush1.msra.mxu0 %v921
    %1052 = vmatprep.subr.mxu0 0.0
    %1053 = vmatpush1.msra.mxu0 %v922
    %1054 = vmatprep.subr.mxu0 0.0
    %1055 = vmatpush1.msra.mxu0 %v923
    %1056 = vmatprep.subr.mxu0 0.0
    %1057 = vmatpush1.msra.mxu0 %v924
    %1058 = vmatprep.subr.mxu0 0.0
    %1059 = vmatpush1.msra.mxu0 %v925
    %1060 = vmatprep.subr.mxu0 0.0
    %1061 = vmatpush1.msra.mxu0 %v926
    %1062 = vmatprep.subr.mxu0 0.0
    %1063 = vmatpush1.msra.mxu0 %v927
    %1064 = vmatprep.subr.mxu0 0.0
    %1065 = vmatpush1.msra.mxu0 %v928
    %1066 = vmatprep.subr.mxu0 0.0
    %1067 = vmatpush1.msra.mxu0 %v929
    %1068 = vmatprep.subr.mxu0 0.0
    %1069 = vmatpush1.msra.mxu0 %v930
    %1070 = vmatprep.subr.mxu0 0.0
    %1071 = vmatpush1.msra.mxu0 %v931
    %1072 = vmatprep.subr.mxu0 0.0
    %1073 = vmatpush1.msra.mxu0 %v932
    %1074 = vmatprep.mubr.f32.mxu0 %v864
    %1075 = vmatmul.mubr.f32.gmra.mrb[0].mxu0 %v863
    %v1076 = vpop.f32.mrb[0].mxu0
    %v1077 = vadd.f32 %v1007, %v1076
    %v1078 = vpop.f32.mrb[0].mxu0
    %1079 = vdwg.mxu0
    %1080 = vst [vmem:[%s5] sm:$0xff] %v1077
    // Predicated region
    $region22: #{trailer_text_forward.1} parent=1 // pred_check
      _
    $region23: #{trailer_text_forward.1} parent=1 // pred_check_branch
      %1082 = sbr.rel (0) target = $region25
    $region24: #{trailer_text_forward.1} parent=1 // pred_region
      _
    $region25: #{trailer_text_forward.1} parent=1 // pred_fallthru
      _
    // Predicated region
    $region26: #{trailer_text_forward.1} parent=1 // pred_check
      _
    $region27: #{trailer_text_forward.1} parent=1 // pred_check_branch
      %1084 = sbr.rel (0) target = $region29
    $region28: #{trailer_text_forward.1} parent=1 // pred_region
      %s1086 = ssub.s32 512, 512
      %1087 = vsyncadd [#allocation3], %s1086
      %s1089 = sshll.u32 [#allocation2], 4
      %s1090 = int_to_ptr.vmem [resolvable:$true] %s1089
      %1092 = dma.vmem_to_hbm [thread:$0]  %s1090, 512, %s6, [#allocation3]
    $region29: #{trailer_text_forward.1} parent=1 // pred_fallthru
      _
    // Predicated region
    $region30: #{trailer_text_forward.1} parent=1 // pred_check
      _
    $region31: #{trailer_text_forward.1} parent=1 // pred_check_branch
      %1094 = sbr.rel (0) target = $region33
    $region32: #{trailer_text_forward.1} parent=1 // pred_region
      _
    $region33: #{trailer_text_forward.1} parent=1 // pred_fallthru
      _
    // Predicated region
    $region34: #{trailer_text_forward.1} parent=1 // pred_check
      _
    $region35: #{trailer_text_forward.1} parent=1 // pred_check_branch
      %1096 = sbr.rel (0) target = $region37
    $region36: #{trailer_text_forward.1} parent=1 // pred_region
      %1097 = dma.done [#allocation3], 512
    $region37: #{trailer_text_forward.1} parent=1 // pred_fallthru
      _
    %1098 = vsyncpa [#allocation3], 1

</llo_original>
